<compile_context>
chip_gen: v6e
topology: v6e:2x2x1
jax: 0.10.0
libtpu: 0.0.40
codegen_flags: <defaults>
</compile_context>

<pallas_src>
import functools

import jax
import jax.numpy as jnp
from jax import lax
from jax.experimental import pallas as pl
from jax.experimental.pallas import tpu as pltpu


def _simclr_tile_kernel(anchor_ref, view1_ref, contrast_ref, out_ref, *,
                        inv_t, b, b_tile):
    i = pl.program_id(0)
    row_start = i * b_tile

    anchor = anchor_ref[...]        # [b_tile, dim]  (input dtype)
    view1 = view1_ref[...]          # [b_tile, dim]
    contrast = contrast_ref[...]    # [2b, dim]; row 2g = view0[g], row 2g+1 = view1[g]

    # logits = (anchor / T) @ contrast^T on the MXU, f32 accumulation, no transpose.
    anchor_scaled = anchor * inv_t
    logits = lax.dot_general(
        anchor_scaled, contrast,
        dimension_numbers=(((1,), (1,)), ((), ())),
        preferred_element_type=jnp.float32)                          # [b_tile, 2b]

    # Exclude the self column (column 2*g for global anchor row g).
    row_idx = lax.broadcasted_iota(jnp.int32, logits.shape, 0)
    col_idx = lax.broadcasted_iota(jnp.int32, logits.shape, 1)
    self_col = 2 * (row_idx + row_start)
    logits = jnp.where(col_idx == self_col, jnp.float32(-1e30), logits)

    # Row-wise log-sum-exp over the remaining 2b-1 columns.
    m = jnp.max(logits, axis=1, keepdims=True)                        # [b_tile, 1]
    denom = jnp.sum(jnp.exp(logits - m), axis=1, keepdims=True)       # [b_tile, 1]

    # Positive-pair logit: diag(anchor @ view1^T) / T, computed elementwise.
    pos = jnp.sum(anchor.astype(jnp.float32) * view1.astype(jnp.float32),
                  axis=1, keepdims=True) * jnp.float32(inv_t)         # [b_tile, 1]

    # log-probability at the positive pair (mask.sum() == 1 per row, so no divide).
    log_prob_pos = pos - m - jnp.log(denom)                           # [b_tile, 1]

    # Mask padded rows of a remainder tile out of the partial sum.
    g = lax.broadcasted_iota(jnp.int32, log_prob_pos.shape, 0) + row_start
    log_prob_pos = jnp.where(g < b, log_prob_pos, 0.0)

    partial = jnp.sum(log_prob_pos)                                   # scalar
    out_ref[...] = partial + jnp.zeros((1, 128), jnp.float32)         # lane-dense store


def simclr_loss(features, temperature, *, b_tile=None):
    """features: [b, 2, dim] -> scalar SimCLR loss (float32)."""
    b, n, dim = features.shape
    assert n == 2, "SimCLR expects exactly 2 views per sample"

    if b_tile is None:
        # 256 keeps the f32 [b_tile, 2b] temps modest even for large b; fits
        # v7x's 64 MiB VMEM and v5e's scoped budget with the limit below.
        b_tile = b if b <= 256 else 256
    num_tiles = pl.cdiv(b, b_tile)

    anchor = features[:, 0, :]                    # [b, dim]
    view1 = features[:, 1, :]                     # [b, dim]
    contrast = features.reshape(2 * b, dim)       # [2b, dim], free reshape (interleaved views)

    itemsize = jnp.dtype(features.dtype).itemsize
    vmem_est = (2 * (2 * b * dim) * itemsize      # resident contrast (+ headroom)
                + 4 * b_tile * dim * itemsize     # double-buffered anchor + view1 tiles
                + 4 * b_tile * (2 * b) * 4        # logits / exp / mask f32 temporaries
                + (1 << 20))
    vmem_limit = int(min(max(vmem_est, 32 * 1024 * 1024), 64 * 1024 * 1024))

    kernel = functools.partial(_simclr_tile_kernel,
                               inv_t=1.0 / float(temperature), b=b, b_tile=b_tile)

    partials = pl.pallas_call(
        kernel,
        grid=(num_tiles,),
        out_shape=jax.ShapeDtypeStruct((num_tiles, 128), jnp.float32),
        in_specs=[
            pl.BlockSpec((b_tile, dim), lambda i: (i, 0)),    # anchor tile (pipelined)
            pl.BlockSpec((b_tile, dim), lambda i: (i, 0)),    # view1 tile (pipelined)
            pl.BlockSpec((2 * b, dim), lambda i: (0, 0)),     # contrast, resident
        ],
        out_specs=pl.BlockSpec((1, 128), lambda i: (i, 0)),
        compiler_params=pltpu.CompilerParams(
            dimension_semantics=("parallel",),
            vmem_limit_bytes=vmem_limit),
    )(anchor, view1, contrast)

    # TODO(synk): for very large batches (2b >= ~8k) also tile the contrast/column
    # axis with an online (flash-style) softmax instead of keeping it resident.
    return -jnp.sum(partials[:, 0]) / b


def _simclr_loss_ref(features, temperature):
    """Pure-JAX reference mirroring the PyTorch forward, for correctness check."""
    b, n, dim = features.shape
    anchor = features[:, 0]
    contrast = jnp.concatenate([features[:, 0], features[:, 1]], axis=0)
    dot = (anchor @ contrast.T) / temperature
    logits = dot - jnp.max(dot, axis=1, keepdims=True)
    mask = jnp.tile(jnp.eye(b, dtype=jnp.float32), (1, 2))
    logits_mask = jnp.ones((b, 2 * b), jnp.float32).at[jnp.arange(b), jnp.arange(b)].set(0.0)
    mask = mask * logits_mask
    exp_logits = jnp.exp(logits) * logits_mask
    log_prob = logits - jnp.log(jnp.sum(exp_logits, axis=1, keepdims=True))
    return -jnp.mean(jnp.sum(mask * log_prob, axis=1) / jnp.sum(mask, axis=1))


if __name__ == "__main__":
    key = jax.random.PRNGKey(0)
    b, n, dim = 8, 2, 32
    temperature = 0.5
    features = jax.random.normal(key, (b, n, dim), dtype=jnp.float32)

    loss = jax.block_until_ready(simclr_loss(features, temperature))
    ref = jax.block_until_ready(_simclr_loss_ref(features, temperature))

    assert jnp.allclose(loss, ref, atol=1e-3, rtol=1e-4), (loss, ref)
    print("KERNEL_OK")
</pallas_src>

<mosaic_0001>
module attributes {stable_mosaic.version = 11 : i64} {
  func.func @_simclr_tile_kernel(%arg0: i32, %arg1: memref<8x32xf32, #tpu.memory_space<vmem>>, %arg2: memref<8x32xf32, #tpu.memory_space<vmem>>, %arg3: memref<16x32xf32, #tpu.memory_space<vmem>>, %arg4: memref<1x128xf32, #tpu.memory_space<vmem>>) attributes {dimension_semantics = [#tpu.dimension_semantics<parallel>], iteration_bounds = array<i64: 1>, scalar_prefetch = 0 : i64, scratch_operands = 0 : i64, tpu.core_type = #tpu.core_type<tc>, window_params = [{transform_indices = @transform_0, window_bounds = array<i64: 8, 32>}, {transform_indices = @transform_1, window_bounds = array<i64: 8, 32>}, {pipeline_mode = #tpu.pipeline_mode<synchronous>, transform_indices = @transform_2, window_bounds = array<i64: 16, 32>}, {transform_indices = @transform_3, window_bounds = array<i64: 1, 128>}]} {
    %c8_i32 = arith.constant 8 : i32
    %0 = arith.muli %arg0, %c8_i32 : i32
    %c0 = arith.constant 0 : index
    %c0_0 = arith.constant 0 : index
    %1 = vector.load %arg1[%c0, %c0_0] : memref<8x32xf32, #tpu.memory_space<vmem>>, vector<8x32xf32>
    %c0_1 = arith.constant 0 : index
    %c0_2 = arith.constant 0 : index
    %2 = vector.load %arg2[%c0_1, %c0_2] : memref<8x32xf32, #tpu.memory_space<vmem>>, vector<8x32xf32>
    %c0_3 = arith.constant 0 : index
    %c0_4 = arith.constant 0 : index
    %3 = vector.load %arg3[%c0_3, %c0_4] : memref<16x32xf32, #tpu.memory_space<vmem>>, vector<16x32xf32>
    %cst = arith.constant 2.000000e+00 : f32
    %4 = vector.broadcast %cst : f32 to vector<8x32xf32>
    %5 = arith.mulf %1, %4 : vector<8x32xf32>
    %cst_5 = arith.constant dense<0.000000e+00> : vector<8x16xf32>
    %6 = tpu.matmul %5, %3, %cst_5 {dimension_numbers = #tpu.dot_dimension_numbers<[1], [1], [0], [0], [0, 0, 1, 0], [], []>} : vector<8x32xf32>, vector<16x32xf32>, vector<8x16xf32> -> vector<8x16xf32>
    %7 = tpu.iota {dimensions = array<i32: 0>} : vector<8x16xi32>
    %8 = tpu.iota {dimensions = array<i32: 1>} : vector<8x16xi32>
    %9 = vector.broadcast %0 : i32 to vector<8x16xi32>
    %10 = arith.addi %7, %9 : vector<8x16xi32>
    %c2_i32 = arith.constant 2 : i32
    %11 = vector.broadcast %c2_i32 : i32 to vector<8x16xi32>
    %12 = arith.muli %11, %10 : vector<8x16xi32>
    %13 = arith.cmpi eq, %8, %12 : vector<8x16xi32>
    %cst_6 = arith.constant -1.000000e+30 : f32
    %14 = vector.broadcast %cst_6 : f32 to vector<8x16xf32>
    %15 = arith.select %13, %14, %6 : vector<8x16xi1>, vector<8x16xf32>
    %cst_7 = arith.constant dense<0xFF800000> : vector<8xf32>
    %16 = vector.multi_reduction <maximumf>, %15, %cst_7 [1] : vector<8x16xf32> to vector<8xf32>
    %17 = vector.shape_cast %16 : vector<8xf32> to vector<8x1xf32>
    %18 = vector.broadcast %17 : vector<8x1xf32> to vector<8x16xf32>
    %19 = arith.subf %15, %18 : vector<8x16xf32>
    %20 = math.exp %19 : vector<8x16xf32>
    %cst_8 = arith.constant dense<0.000000e+00> : vector<8xf32>
    %21 = vector.multi_reduction <add>, %20, %cst_8 [1] : vector<8x16xf32> to vector<8xf32>
    %22 = vector.shape_cast %21 : vector<8xf32> to vector<8x1xf32>
    %23 = arith.mulf %1, %2 : vector<8x32xf32>
    %cst_9 = arith.constant dense<0.000000e+00> : vector<8xf32>
    %24 = vector.multi_reduction <add>, %23, %cst_9 [1] : vector<8x32xf32> to vector<8xf32>
    %25 = vector.shape_cast %24 : vector<8xf32> to vector<8x1xf32>
    %cst_10 = arith.constant 2.000000e+00 : f32
    %26 = vector.broadcast %cst_10 : f32 to vector<8x1xf32>
    %27 = arith.mulf %25, %26 : vector<8x1xf32>
    %28 = arith.subf %27, %17 : vector<8x1xf32>
    %29 = math.log %22 : vector<8x1xf32>
    %30 = arith.subf %28, %29 : vector<8x1xf32>
    %31 = tpu.iota {dimensions = array<i32: 0>} : vector<8x1xi32>
    %32 = vector.broadcast %0 : i32 to vector<8x1xi32>
    %33 = arith.addi %31, %32 : vector<8x1xi32>
    %c8_i32_11 = arith.constant 8 : i32
    %34 = vector.broadcast %c8_i32_11 : i32 to vector<8x1xi32>
    %35 = arith.cmpi slt, %33, %34 : vector<8x1xi32>
    %cst_12 = arith.constant 0.000000e+00 : f32
    %36 = vector.broadcast %cst_12 : f32 to vector<8x1xf32>
    %37 = arith.select %35, %30, %36 : vector<8x1xi1>, vector<8x1xf32>
    %38 = vector.shape_cast %37 : vector<8x1xf32> to vector<1x8x1xf32>
    %cst_13 = arith.constant dense<0.000000e+00> : vector<1xf32>
    %39 = vector.multi_reduction <add>, %38, %cst_13 [1, 2] : vector<1x8x1xf32> to vector<1xf32>
    %40 = vector.shape_cast %39 : vector<1xf32> to vector<1x1x1xf32>
    %41 = vector.extract %40[0, 0, 0] : f32 from vector<1x1x1xf32>
    %cst_14 = arith.constant 0.000000e+00 : f32
    %42 = vector.broadcast %cst_14 : f32 to vector<1x128xf32>
    %43 = vector.broadcast %41 : f32 to vector<1x128xf32>
    %44 = arith.addf %43, %42 : vector<1x128xf32>
    %c0_15 = arith.constant 0 : index
    %c0_16 = arith.constant 0 : index
    %45 = vector.load %arg4[%c0_15, %c0_16] : memref<1x128xf32, #tpu.memory_space<vmem>>, vector<1x128xf32>
    tpu.vector_store %arg4[%c0_15, %c0_16], %44 {strides = array<i32>} : memref<1x128xf32, #tpu.memory_space<vmem>>, vector<1x128xf32>,
    return
  }
  func.func @transform_0(%arg0: i32) -> (i32, i32) {
    %c0_i32 = arith.constant 0 : i32
    %c0_i32_0 = arith.constant 0 : i32
    return %arg0, %c0_i32 : i32, i32
  }
  func.func @transform_1(%arg0: i32) -> (i32, i32) {
    %c0_i32 = arith.constant 0 : i32
    %c0_i32_0 = arith.constant 0 : i32
    return %arg0, %c0_i32 : i32, i32
  }
  func.func @transform_2(%arg0: i32) -> (i32, i32) {
    %c0_i32 = arith.constant 0 : i32
    %c0_i32_0 = arith.constant 0 : i32
    %c0_i32_1 = arith.constant 0 : i32
    return %c0_i32, %c0_i32_0 : i32, i32
  }
  func.func @transform_3(%arg0: i32) -> (i32, i32) {
    %c0_i32 = arith.constant 0 : i32
    %c0_i32_0 = arith.constant 0 : i32
    return %arg0, %c0_i32 : i32, i32
  }
}

</mosaic_0001>

<llo_original>
// kernel: tpu_custom_call.1
$region0: #{tpu_custom_call.1}
  #allocation0 [shape = 'u32[]', space=smem, size = 0x4, offset = 0x4, fixed_abs, tag = 'smem constant byte address 0x4 - core index']
  #allocation1 [shape = 'u32[144,128]{1,0:T(1,128)}', space=vmem, size = 0x12000, scoped, tag = 'internal scratch']
  %s0 = inlined_call_operand.hbm [shape: f32[8,32], index: 0, kind: input, shape index: {}]
  %s1 = inlined_call_operand.hbm [shape: f32[8,32], index: 1, kind: input, shape index: {}]
  %s2 = inlined_call_operand.hbm [shape: f32[16,32], index: 2, kind: input, shape index: {}]
  %s3 = inlined_call_operand.hbm [shape: f32[1,128], index: 3, kind: output, shape index: {}]
  %s4 = sld [smem:[#allocation0]]
  $region34: #{tpu_custom_call.1} parent=0
    _
  %s6 = ssub.s32 1, %s4
  %s7 = scalar_select 0, %s6, %s4
  $region1: #{tpu_custom_call.1} parent=0
    #allocation2 [shape = 'u8[4096]{0}', space=vmem, size = 0x1000, scoped, tag = 'input window, operand 0, single buffered']
    #allocation3 [shape = 's32[1]{0}', space=sflag, size = 0x4, scoped, tag = 'scoped memory for tpu_custom_call.1']
    #allocation4 [shape = 's32[1]{0}', space=sflag, size = 0x4, scoped, tag = 'scoped memory for tpu_custom_call.1']
    #allocation5 [shape = 'u8[4096]{0}', space=vmem, size = 0x1000, scoped, tag = 'input window, operand 1, single buffered']
    #allocation6 [shape = 's32[1]{0}', space=sflag, size = 0x4, scoped, tag = 'scoped memory for tpu_custom_call.1']
    #allocation7 [shape = 'u8[8192]{0}', space=vmem, size = 0x2000, scoped, tag = 'input window, operand 2, single buffered']
    #allocation8 [shape = 'u8[512]{0}', space=vmem, size = 0x400, scoped, tag = 'output window, operand 0, single buffered']
    %8 = vsyncpa [#allocation3], 0
    %9 = vsyncpa [#allocation6], 0
    %10 = vsyncpa [#allocation4], 0
    // Predicated region
    $region2: #{tpu_custom_call.1} parent=1 // pred_check
      _
    $region3: #{tpu_custom_call.1} parent=1 // pred_check_branch
      %12 = sbr.rel (0) target = $region5
    $region4: #{tpu_custom_call.1} parent=1 // pred_region
      %s14 = ssub.s32 128, 128
      %15 = vsyncadd [#allocation3], %s14
      %s17 = sshll.u32 [#allocation2], 4
      %s18 = int_to_ptr.vmem [resolvable:$true] %s17
      %20 = dma.hbm_to_vmem [thread:$0]  %s0, 128, %s18, [#allocation3]
    $region5: #{tpu_custom_call.1} parent=1 // pred_fallthru
      _
    // Predicated region
    $region6: #{tpu_custom_call.1} parent=1 // pred_check
      _
    $region7: #{tpu_custom_call.1} parent=1 // pred_check_branch
      %22 = sbr.rel (0) target = $region9
    $region8: #{tpu_custom_call.1} parent=1 // pred_region
      %s24 = ssub.s32 128, 128
      %25 = vsyncadd [#allocation6], %s24
      %s27 = sshll.u32 [#allocation5], 4
      %s28 = int_to_ptr.vmem [resolvable:$true] %s27
      %30 = dma.hbm_to_vmem [thread:$0]  %s1, 128, %s28, [#allocation6]
    $region9: #{tpu_custom_call.1} parent=1 // pred_fallthru
      _
    // Predicated region
    $region10: #{tpu_custom_call.1} parent=1 // pred_check
      _
    $region11: #{tpu_custom_call.1} parent=1 // pred_check_branch
      %32 = sbr.rel (0) target = $region13
    $region12: #{tpu_custom_call.1} parent=1 // pred_region
      %s34 = ssub.s32 256, 256
      %35 = vsyncadd [#allocation6], %s34
      %s36 = sshll.u32 [#allocation7], 4
      %s37 = int_to_ptr.vmem [resolvable:$true] %s36
      %42 = dma.hbm_to_vmem [thread:$0]  %s2, 256, %s37, [#allocation6], 128, 128, 8
    $region13: #{tpu_custom_call.1} parent=1 // pred_fallthru
      _
    // Predicated region
    $region14: #{tpu_custom_call.1} parent=1 // pred_check
      _
    $region15: #{tpu_custom_call.1} parent=1 // pred_check_branch
      %44 = sbr.rel (0) target = $region17
    $region16: #{tpu_custom_call.1} parent=1 // pred_region
      %45 = dma.done [#allocation3], 128
    $region17: #{tpu_custom_call.1} parent=1 // pred_fallthru
      _
    // Predicated region
    $region18: #{tpu_custom_call.1} parent=1 // pred_check
      _
    $region19: #{tpu_custom_call.1} parent=1 // pred_check_branch
      %47 = sbr.rel (0) target = $region21
    $region20: #{tpu_custom_call.1} parent=1 // pred_region
      %48 = dma.done [#allocation6], 128
    $region21: #{tpu_custom_call.1} parent=1 // pred_fallthru
      _
    // Predicated region
    $region22: #{tpu_custom_call.1} parent=1 // pred_check
      _
    $region23: #{tpu_custom_call.1} parent=1 // pred_check_branch
      %50 = sbr.rel (0) target = $region25
    $region24: #{tpu_custom_call.1} parent=1 // pred_region
      %51 = dma.done [#allocation6], 256
    $region25: #{tpu_custom_call.1} parent=1 // pred_fallthru
      _
    %s52 = smul.u32 0, 8
    %v53 = vld [vmem:[#allocation2] sm:$0xff]
    %v54 = vld [vmem:[#allocation5] sm:$0xff]
    %v55 = vld [vmem:[#allocation7] sm:$0xff]
    %v56 = vld [vmem:[#allocation7 + $0x8] sm:$0xff]
    %v57 = vmul.f32 %v53, 2.0
    %vm58 = vcmask 261120
    %v60 = vsel %vm58, %v57, 0
    %v63 = vsel %vm58, %v55, 0
    %v66 = vsel %vm58, %v56, 0
    %68 = vmatprep.subr.mxu0 0.0
    %69 = vmatpush1.xpose.msra.mxu0 0.0
    %70 = vmatprep.subr.mxu0 0.0
    %71 = vmatpush1.xpose.msra.mxu0 0.0
    %72 = vmatprep.subr.mxu0 0.0
    %73 = vmatpush1.xpose.msra.mxu0 0.0
    %74 = vmatprep.subr.mxu0 0.0
    %75 = vmatpush1.xpose.msra.mxu0 0.0
    %76 = vmatprep.subr.mxu0 0.0
    %77 = vmatpush1.xpose.msra.mxu0 0.0
    %78 = vmatprep.subr.mxu0 0.0
    %79 = vmatpush1.xpose.msra.mxu0 0.0
    %80 = vmatprep.subr.mxu0 0.0
    %81 = vmatpush1.xpose.msra.mxu0 0.0
    %82 = vmatprep.subr.mxu0 0.0
    %83 = vmatpush1.xpose.msra.mxu0 0.0
    %84 = vmatprep.subr.mxu0 0.0
    %85 = vmatpush1.xpose.msra.mxu0 0.0
    %86 = vmatprep.subr.mxu0 0.0
    %87 = vmatpush1.xpose.msra.mxu0 0.0
    %88 = vmatprep.subr.mxu0 0.0
    %89 = vmatpush1.xpose.msra.mxu0 0.0
    %90 = vmatprep.subr.mxu0 0.0
    %91 = vmatpush1.xpose.msra.mxu0 0.0
    %92 = vmatprep.subr.mxu0 0.0
    %93 = vmatpush1.xpose.msra.mxu0 0.0
    %94 = vmatprep.subr.mxu0 0.0
    %95 = vmatpush1.xpose.msra.mxu0 0.0
    %96 = vmatprep.subr.mxu0 0.0
    %97 = vmatpush1.xpose.msra.mxu0 %v66
    %98 = vmatprep.subr.mxu0 0.0
    %99 = vmatpush1.xpose.msra.mxu0 %v63
    %100 = vmatprep.subr.mxu0 0.0
    %101 = vmatpush2.xpose.msra.mxu0 0.0
    %102 = vmatprep.subr.mxu0 0.0
    %103 = vmatpush2.xpose.msra.mxu0 0.0
    %104 = vmatprep.subr.mxu0 0.0
    %105 = vmatpush2.xpose.msra.mxu0 0.0
    %106 = vmatprep.subr.mxu0 0.0
    %107 = vmatpush2.xpose.msra.mxu0 0.0
    %108 = vmatprep.subr.mxu0 0.0
    %109 = vmatpush2.xpose.msra.mxu0 0.0
    %110 = vmatprep.subr.mxu0 0.0
    %111 = vmatpush2.xpose.msra.mxu0 0.0
    %112 = vmatprep.subr.mxu0 0.0
    %113 = vmatpush2.xpose.msra.mxu0 0.0
    %114 = vmatprep.subr.mxu0 0.0
    %115 = vmatpush2.xpose.msra.mxu0 0.0
    %116 = vmatprep.subr.mxu0 0.0
    %117 = vmatpush2.xpose.msra.mxu0 0.0
    %118 = vmatprep.subr.mxu0 0.0
    %119 = vmatpush2.xpose.msra.mxu0 0.0
    %120 = vmatprep.subr.mxu0 0.0
    %121 = vmatpush2.xpose.msra.mxu0 0.0
    %122 = vmatprep.subr.mxu0 0.0
    %123 = vmatpush2.xpose.msra.mxu0 0.0
    %124 = vmatprep.subr.mxu0 0.0
    %125 = vmatpush2.xpose.msra.mxu0 0.0
    %126 = vmatprep.subr.mxu0 0.0
    %127 = vmatpush2.xpose.msra.mxu0 0.0
    %128 = vmatprep.subr.mxu0 0.0
    %129 = vmatpush2.xpose.msra.mxu0 0.0
    %130 = vmatprep.subr.mxu0 0.0
    %131 = vmatpush2.xpose.msra.mxu0 0.0
    %132 = vmatprep.mubr.f32.mxu0 0.0
    %133 = vmatmul.mubr.f32.gmra.mxu0 %v60
    %v134 = vpop.f32.mrf.mxu0
    %v135 = vadd.f32 0.0, %v134
    %v136 = vpop.f32.mrf.mxu0
    %137 = vdwg.mxu0
    %v138 = vlaneseq
    %v139 = vshrl.u32 %v138, 7
    %v140 = vlaneseq
    %v141 = vand.u32 %v140, 127
    %v142 = vstv %s52
    %v143 = vadd.s32 %v139, %v142
    %v144 = vmul.u32 %v143, 2
    %vm145 = vcmp.eq.s32.totalorder %v141, %v144
    %v146 = vsel %vm145, -1e+30, %v135
    %vm147 = vcmask 130048
    %v148 = vsel %vm147, %v146, -inf
    %149 = vmax.xlane.f32.xlu0 %v148
    %v150 = vpop.xlane.xlu0 %149
    %v151 = vsub.f32 %v146, %v150
    %v152 = vmul.f32 %v151, 1.442695
    %v153 = vpow.pop %v152
    %v154 = vsel %vm147, %v153, 0.0
    %155 = vadd.xlane.f32.xlu0 %v154
    %v156 = vpop.xlane.xlu0 %155
    %v157 = vmul.f32 %v53, %v54
    %v158 = vsel %vm58, %v157, 0.0
    %159 = vadd.xlane.f32.xlu0 %v158
    %v160 = vpop.xlane.xlu0 %159
    %v161 = vmul.f32 %v160, 2.0
    %v162 = vsub.f32 %v161, %v150
    %v163 = vlog2.pop %v156
    %v164 = vmul.f32 %v163, 0.6931472
    %v165 = vsub.f32 %v162, %v164
    %vm166 = vcmp.lt.s32.totalorder %v143, 8
    %v167 = vsel %vm166, %v165, 0.0
    %vm168 = vcmask 7168
    %v169 = vsel %vm168, %v167, 0.0
    %170 = vadd.xlane.f32.xlu0 %v169
    %v171 = vpop.xlane.xlu0 %170
    %v172 = vrot.slane %v171, 4
    %v173 = vadd.f32 %v171, %v172
    %v174 = vrot.slane %v173, 2
    %v175 = vadd.f32 %v173, %v174
    %v176 = vrot.slane %v175, 1
    %v177 = vadd.f32 %v175, %v176
    %s178 = vtos %v177
    %v179 = vstv %s178
    %v180 = vadd.f32 %v179, 0.0
    %181 = vst [vmem:[#allocation8] sm:$0x1] %v180
    // Predicated region
    $region26: #{tpu_custom_call.1} parent=1 // pred_check
      _
    $region27: #{tpu_custom_call.1} parent=1 // pred_check_branch
      %183 = sbr.rel (0) target = $region29
    $region28: #{tpu_custom_call.1} parent=1 // pred_region
      %s185 = ssub.s32 16, 16
      %186 = vsyncadd [#allocation4], %s185
      %s188 = sshll.u32 [#allocation8], 4
      %s189 = int_to_ptr.vmem [resolvable:$true] %s188
      %191 = dma.vmem_to_hbm [thread:$0]  %s189, 16, %s3, [#allocation4]
    $region29: #{tpu_custom_call.1} parent=1 // pred_fallthru
      _
    // Predicated region
    $region30: #{tpu_custom_call.1} parent=1 // pred_check
      _
    $region31: #{tpu_custom_call.1} parent=1 // pred_check_branch
      %193 = sbr.rel (0) target = $region33
    $region32: #{tpu_custom_call.1} parent=1 // pred_region
      %194 = dma.done [#allocation4], 16
    $region33: #{tpu_custom_call.1} parent=1 // pred_fallthru
      _
    %195 = vsyncpa [#allocation3], 1
    %196 = vsyncpa [#allocation6], 1
    %197 = vsyncpa [#allocation4], 1

</llo_original>
